<compile_context>
chip_gen: v6e
topology: v6e:2x2x1
jax: 0.10.0
libtpu: 0.0.40
codegen_flags: <defaults>
</compile_context>

<pallas_src>
import math

import jax
import jax.numpy as jnp
from jax.experimental import pallas as pl
from jax.experimental.pallas import tpu as pltpu


# ----------------------------- kernels ------------------------------------- #

def _make_kernel(has_bias):
    """Kernel bodies.
         x_ref: (B, tk)      activation slice over K (resident when tk == K)
         w_ref: (tk, tm)     pre-transposed weight strip (the big DMA)
         b_ref: (1, tm)      bias tile (bias variant only)
         o_ref: (B, tm) f32  resident accumulator / output tile (lane-dense)
    """
    if has_bias:
        def kernel(x_ref, w_ref, b_ref, o_ref):
            @pl.when(pl.program_id(1) == 0)
            def _():
                o_ref[...] = jnp.broadcast_to(
                    b_ref[...].astype(jnp.float32), o_ref.shape)

            o_ref[...] += jax.lax.dot_general(
                x_ref[...], w_ref[...],
                dimension_numbers=(((1,), (0,)), ((), ())),  # no in-kernel transpose
                preferred_element_type=jnp.float32,
            )
        return kernel

    def kernel(x_ref, w_ref, o_ref):
        @pl.when(pl.program_id(1) == 0)
        def _():
            o_ref[...] = jnp.zeros_like(o_ref)

        o_ref[...] += jax.lax.dot_general(
            x_ref[...], w_ref[...],
            dimension_numbers=(((1,), (0,)), ((), ())),
            preferred_element_type=jnp.float32,
        )
    return kernel


# --------------------------- weight preparation ----------------------------- #

def prepare_weight(weight, dtype=None):
    """One-time offline prep: (M, K) -> (K, M), optionally narrowed (bf16).

    Transposing once here gives the natural MXU RHS layout and guarantees no
    per-step XLU transpose of the weight tile inside the kernel; casting to
    bf16 halves the HBM traffic that entirely determines this kernel's runtime.
    """
    w = jnp.asarray(weight)
    if dtype is not None and w.dtype != dtype:
        w = w.astype(dtype)
    return w.T  # (K, M)


# --------------------------- tiling helpers --------------------------------- #

def _vmem_capacity_bytes():
    try:
        return int(pltpu.get_tpu_info().vmem_capacity_bytes)
    except Exception:
        return 64 * 1024 * 1024  # conservative: v7x per-TensorCore VMEM


def _choose_tiles(M, K, w_itemsize, weight_budget_bytes):
    """Pick (tm, tk): biggest double-buffered (tk, tm) weight strip that fits."""
    def fits(tm, tk):
        return 2 * tm * tk * w_itemsize <= weight_budget_bytes

    tm_opts = [t for t in (1024, 512, 256, 128) if t <= M and M % t == 0]
    if not tm_opts:
        tm_opts = [M]  # small / odd M: one full block (block dim == array dim)

    # Prefer >=4 grid steps along M (>=2 per TensorCore under v7x megacore
    # sharding so each core can overlap the next strip's DMA with compute),
    # then >=2, then anything; largest tile first inside each class.
    for min_steps in (4, 2, 1):
        for tm in (t for t in tm_opts if M // t >= min_steps):
            if fits(tm, K):
                return tm, K

    # A full-K strip never fits: split K.  Keep each strided weight-DMA row
    # >= 2 KiB so the DMA stays near peak HBM bandwidth.
    tm = tm_opts[-1]
    row_floor = max(128, 2048 // w_itemsize)
    tk_all = [t for t in (32768, 16384, 8192, 4096, 2048, 1024, 512, 256, 128)
              if t < K and K % t == 0]
    tk_opts = [t for t in tk_all if t >= row_floor] or tk_all
    for tk in tk_opts:
        if fits(tm, tk):
            return tm, tk
    # Graceful last resort: smallest splittable tile (budget is conservative).
    return tm, (tk_opts[-1] if tk_opts else K)


# ------------------------------ wrappers ------------------------------------ #

def linear_4bit_prepared(x, w_km, bias=None, *, tm=None, tk=None):
    """y = x @ W_km (+ bias), with W_km the one-time-prepared (K, M) weight."""
    K, M = w_km.shape
    squeeze = (x.ndim == 1)
    x2 = x.reshape(1, -1) if squeeze else x
    B = x2.shape[0]
    assert x2.shape[1] == K, "input length must equal in_features"

    if jnp.issubdtype(w_km.dtype, jnp.floating) and x2.dtype != w_km.dtype:
        x2 = x2.astype(w_km.dtype)   # tiny (B, K) cast so MXU operand dtypes match

    vmem_cap = _vmem_capacity_bytes()
    vmem_limit = int(min(vmem_cap, 128 * 1024 * 1024) * 0.9)  # compiler headroom
    small_bufs = (2 * B * K * x2.dtype.itemsize          # double-buffered x
                  + 4 * (B + 1) * min(M, 1024))          # out tile + bias tile
    weight_budget = int(vmem_limit * 0.85) - small_bufs   # double-buffered W strip

    if tm is None or tk is None:
        a_tm, a_tk = _choose_tiles(M, K, w_km.dtype.itemsize, weight_budget)
        tm = a_tm if tm is None else tm
        tk = a_tk if tk is None else tk
    assert M % tm == 0 and K % tk == 0, "out/in features must divide the tiles"

    grid = (M // tm, K // tk)        # reduction (K) axis last
    has_bias = bias is not None

    in_specs = [
        # x: block index constant over i (and over k when tk == K) -> resident.
        pl.BlockSpec((B, tk), lambda i, k: (0, k)),
        pl.BlockSpec((tk, tm), lambda i, k: (k, i)),   # weight strip (the big DMA)
    ]
    args = [x2, w_km]
    if has_bias:
        b2 = bias.reshape(1, M).astype(jnp.float32)
        in_specs.append(pl.BlockSpec((1, tm), lambda i, k: (0, i)))
        args.append(b2)

    cost = pl.CostEstimate(
        flops=2 * B * M * K,
        transcendentals=0,
        bytes_accessed=(M * K * w_km.dtype.itemsize
                        + B * K * x2.dtype.itemsize
                        + (M * 4 if has_bias else 0)
                        + B * M * 4),
    )

    out = pl.pallas_call(
        _make_kernel(has_bias),
        out_shape=jax.ShapeDtypeStruct((B, M), jnp.float32),
        grid_spec=pltpu.PrefetchScalarGridSpec(
            num_scalar_prefetch=0,
            grid=grid,
            in_specs=in_specs,
            out_specs=pl.BlockSpec((B, tm), lambda i, k: (0, i)),  # resident over K
        ),
        compiler_params=pltpu.CompilerParams(
            dimension_semantics=("parallel", "arbitrary"),
            vmem_limit_bytes=vmem_limit,
        ),
        cost_estimate=cost,
    )(*args)

    return out.reshape(M) if squeeze else out


def linear_4bit(x, weight, bias=None, *, weight_dtype=None, tm=None, tk=None):
    """Module-signature convenience: weight is (out_features, in_features).

    For repeated calls, call prepare_weight() once and use linear_4bit_prepared
    so the transpose / dtype narrowing is not paid per call.
    """
    w_km = prepare_weight(weight, dtype=weight_dtype)
    return linear_4bit_prepared(x, w_km, bias, tm=tm, tk=tk)


# ------------------------------ self-test ----------------------------------- #

if __name__ == "__main__":
    key = jax.random.PRNGKey(0)
    k_w, k_b, k_x, k_w4, k_x4, k_xb = jax.random.split(key, 6)

    # Shapes consistent with the module: in_features=128, out_features=256.
    in_f, out_f = 128, 256
    stdv = 1.0 / math.sqrt(in_f)   # mirrors reset_parameters(): uniform(-stdv, stdv)
    weight = jax.random.uniform(k_w, (out_f, in_f), jnp.float32,
                                minval=-stdv, maxval=stdv)
    bias = jax.random.uniform(k_b, (out_f,), jnp.float32,
                              minval=-stdv, maxval=stdv)
    x = jax.random.normal(k_x, (in_f,), jnp.float32)
    y_ref = weight @ x + bias

    # Case 1: exact f32 path, module-style call.
    y = jax.block_until_ready(linear_4bit(x, weight, bias))
    assert y.shape == (out_f,)
    assert jnp.allclose(y, y_ref, atol=1e-5, rtol=1e-5)

    # Case 2: no bias (bias DMA skipped entirely).
    y2 = jax.block_until_ready(linear_4bit(x, weight))
    assert jnp.allclose(y2, weight @ x, atol=1e-5, rtol=1e-5)

    # Case 3: one-time bf16-prepared weight (half the HBM traffic).
    w_prep = prepare_weight(weight, dtype=jnp.bfloat16)
    y3 = jax.block_until_ready(linear_4bit_prepared(x, w_prep, bias))
    assert jnp.allclose(y3, y_ref, atol=5e-2, rtol=5e-2)

    # Case 4: forced K-split to exercise the accumulate-over-K path.
    in_f4 = 256
    stdv4 = 1.0 / math.sqrt(in_f4)
    weight4 = jax.random.uniform(k_w4, (out_f, in_f4), jnp.float32,
                                 minval=-stdv4, maxval=stdv4)
    x4 = jax.random.normal(k_x4, (in_f4,), jnp.float32)
    y4 = jax.block_until_ready(linear_4bit(x4, weight4, bias, tm=128, tk=128))
    assert jnp.allclose(y4, weight4 @ x4 + bias, atol=1e-5, rtol=1e-5)

    # Case 5: batched activations (B, K) — weight streaming amortized over B.
    B = 8
    xb = jax.random.normal(k_xb, (B, in_f), jnp.float32)
    yb = jax.block_until_ready(linear_4bit(xb, weight, bias))
    assert yb.shape == (B, out_f)
    assert jnp.allclose(yb, xb @ weight.T + bias, atol=1e-5, rtol=1e-5)

    print("KERNEL_OK")
</pallas_src>

<mosaic_0001>
module attributes {stable_mosaic.version = 11 : i64} {
  func.func @kernel(%arg0: i32, %arg1: i32, %arg2: memref<1x128xf32, #tpu.memory_space<vmem>>, %arg3: memref<128x128xf32, #tpu.memory_space<vmem>>, %arg4: memref<1x128xf32, #tpu.memory_space<vmem>>, %arg5: memref<1x128xf32, #tpu.memory_space<vmem>>) attributes {dimension_semantics = [#tpu.dimension_semantics<parallel>, #tpu.dimension_semantics<arbitrary>], iteration_bounds = array<i64: 2, 1>, scalar_prefetch = 0 : i64, scratch_operands = 0 : i64, tpu.core_type = #tpu.core_type<tc>, window_params = [{transform_indices = @transform_0, window_bounds = array<i64: 1, 128>}, {transform_indices = @transform_1, window_bounds = array<i64: 128, 128>}, {transform_indices = @transform_2, window_bounds = array<i64: 1, 128>}, {transform_indices = @transform_3, window_bounds = array<i64: 1, 128>}]} {
    %c0_i32 = arith.constant 0 : i32
    %0 = arith.cmpi eq, %arg1, %c0_i32 : i32
    %1 = arith.extui %0 : i1 to i32
    %c0_i32_0 = arith.constant 0 : i32
    %2 = arith.cmpi ne, %1, %c0_i32_0 : i32
    scf.if %2 {
      %c0_8 = arith.constant 0 : index
      %c0_9 = arith.constant 0 : index
      %9 = vector.load %arg4[%c0_8, %c0_9] : memref<1x128xf32, #tpu.memory_space<vmem>>, vector<1x128xf32>
      %c0_10 = arith.constant 0 : index
      %c0_11 = arith.constant 0 : index
      %10 = vector.load %arg5[%c0_10, %c0_11] : memref<1x128xf32, #tpu.memory_space<vmem>>, vector<1x128xf32>
      tpu.vector_store %arg5[%c0_10, %c0_11], %9 {strides = array<i32>} : memref<1x128xf32, #tpu.memory_space<vmem>>, vector<1x128xf32>,
    } else {
    }
    %c0 = arith.constant 0 : index
    %c0_1 = arith.constant 0 : index
    %3 = vector.load %arg5[%c0, %c0_1] : memref<1x128xf32, #tpu.memory_space<vmem>>, vector<1x128xf32>
    %c0_2 = arith.constant 0 : index
    %c0_3 = arith.constant 0 : index
    %4 = vector.load %arg2[%c0_2, %c0_3] : memref<1x128xf32, #tpu.memory_space<vmem>>, vector<1x128xf32>
    %c0_4 = arith.constant 0 : index
    %c0_5 = arith.constant 0 : index
    %5 = vector.load %arg3[%c0_4, %c0_5] : memref<128x128xf32, #tpu.memory_space<vmem>>, vector<128x128xf32>
    %cst = arith.constant dense<0.000000e+00> : vector<1x128xf32>
    %6 = tpu.matmul %4, %5, %cst {dimension_numbers = #tpu.dot_dimension_numbers<[1], [0], [0], [1], [0, 0, 1, 1], [], []>} : vector<1x128xf32>, vector<128x128xf32>, vector<1x128xf32> -> vector<1x128xf32>
    %7 = arith.addf %3, %6 : vector<1x128xf32>
    %c0_6 = arith.constant 0 : index
    %c0_7 = arith.constant 0 : index
    %8 = vector.load %arg5[%c0_6, %c0_7] : memref<1x128xf32, #tpu.memory_space<vmem>>, vector<1x128xf32>
    tpu.vector_store %arg5[%c0_6, %c0_7], %7 {strides = array<i32>} : memref<1x128xf32, #tpu.memory_space<vmem>>, vector<1x128xf32>,
    return
  }
  func.func @transform_0(%arg0: i32, %arg1: i32) -> (i32, i32) {
    %c0_i32 = arith.constant 0 : i32
    %c0_i32_0 = arith.constant 0 : i32
    return %c0_i32, %arg1 : i32, i32
  }
  func.func @transform_1(%arg0: i32, %arg1: i32) -> (i32, i32) {
    %c0_i32 = arith.constant 0 : i32
    return %arg1, %arg0 : i32, i32
  }
  func.func @transform_2(%arg0: i32, %arg1: i32) -> (i32, i32) {
    %c0_i32 = arith.constant 0 : i32
    %c0_i32_0 = arith.constant 0 : i32
    return %c0_i32, %arg0 : i32, i32
  }
  func.func @transform_3(%arg0: i32, %arg1: i32) -> (i32, i32) {
    %c0_i32 = arith.constant 0 : i32
    %c0_i32_0 = arith.constant 0 : i32
    return %c0_i32, %arg0 : i32, i32
  }
}

</mosaic_0001>

<llo_original>
// kernel: tpu_custom_call.1
$region0: #{tpu_custom_call.1}
  #allocation0 [shape = 'u32[]', space=smem, size = 0x4, offset = 0x4, fixed_abs, tag = 'smem constant byte address 0x4 - core index']
  #allocation1 [shape = 'u32[144,128]{1,0:T(1,128)}', space=vmem, size = 0x12000, scoped, tag = 'internal scratch']
  %s0 = inlined_call_operand.hbm [shape: f32[1,128], index: 0, kind: input, shape index: {}]
  %s1 = inlined_call_operand.hbm [shape: f32[128,256], index: 1, kind: input, shape index: {}]
  %s2 = inlined_call_operand.vmem [shape: f32[1,256], index: 2, kind: input, shape index: {}]
  %s3 = inlined_call_operand.hbm [shape: f32[1,256], index: 3, kind: output, shape index: {}]
  %s4 = sld [smem:[#allocation0]]
  $region57: #{tpu_custom_call.1} parent=0
    _
  %s6 = ssub.s32 1, %s4
  %s7 = scalar_select 0, %s6, %s4
  $region1: #{tpu_custom_call.1} parent=0
    #allocation2 [shape = 'u8[512]{0}', space=vmem, size = 0x400, scoped, tag = 'input window, operand 0, single buffered']
    #allocation3 [shape = 's32[2]{0}', space=sflag, size = 0x8, scoped, tag = 'scoped memory for tpu_custom_call.1']
    #allocation4 [shape = 's32[2]{0}', space=sflag, size = 0x8, scoped, tag = 'scoped memory for tpu_custom_call.1']
    #allocation5 [shape = 'u8[131072]{0}', space=vmem, size = 0x20000, scoped, tag = 'input window, operand 1']
    #allocation6 [shape = 's32[2]{0}', space=sflag, size = 0x8, scoped, tag = 'scoped memory for tpu_custom_call.1']
    #allocation7 [shape = 'u8[1024]{0}', space=vmem, size = 0x400, scoped, tag = 'output window, operand 0']
    %8 = vsyncpa [#allocation3], 0
    %9 = vsyncpa [#allocation6], 0
    %s10 = scalar_lea.sflag [#allocation6], 1
    %11 = vsyncpa %s10, 0
    %12 = vsyncpa [#allocation4], 0
    %s13 = scalar_lea.sflag [#allocation4], 1
    %14 = vsyncpa %s13, 0
    loop: start=0, step=1, limit=4
    $region2: #{tpu_custom_call.1} parent=1 // loop_pre_header
      _
    $region3: #{tpu_custom_call.1} parent=1 // loop_header
      %s16 = sphi 0, %s20
      %p17 = scmp.ge.s32.totalorder %s16, 4
      %s23 = sphi 0, %s35
      %s24 = sphi 0, %s31
      %s25 = sphi 0, %s23
      %s26 = sphi 0, %s24
      %s27 = sphi 0, %s25
      %s28 = sphi 0, %s26
      %s38 = sphi 0, %s40
      %s41 = sphi 0, %s38
      %s42 = sphi 0, %s41
      %s58 = sphi 0, %s42
      %s66 = sphi 0, %s68
      %s69 = sphi 0, %s66
      %s70 = sphi 0, %s69
      %s86 = sphi 0, %s70
      %s92 = sphi 0, %s94
      %s95 = sphi 0, %s92
      %s96 = sphi 0, %s95
      %s112 = sphi 0, %s96
      %s118 = sphi 0, %s120
      %s121 = sphi 0, %s118
      %s122 = sphi 0, %s121
      %s138 = sphi 0, %s122
    $region4: #{tpu_custom_call.1} parent=1 // loop_header_branch
      %19 = sbr.rel (%p17) target = $region8
    $region5: #{tpu_custom_call.1} parent=1 // loop_body
      %s21 = ssub.s32 %s16, 1
      %s22 = ssub.s32 %s16, 2
      %s29 = sadd.s32 1, %s24
      %p30 = scmp.ge.s32.totalorder %s29, 1
      %s31 = scalar_select %p30, 0, %s29
      %s32 = sadd.s32 1, %s23
      %s33 = scalar_select %p30, %s32, %s23
      %p34 = scmp.ge.s32.totalorder %s33, 2
      %s35 = scalar_select %p34, 0, %s33
      %s36 = ssub.s32 %s24, %s31
      %p37 = scmp.eq.s32.totalorder %s36, 0
      %s39 = sadd.s32 %s38, 1
      %s40 = scalar_select %p37, %s38, %s39
      %p43 = pneg %p37
      %p44 = scmp.eq.s32.totalorder %s16, 1
      %p45 = por %p43, %p44
      %p46 = scmp.ne.s32.totalorder %s38, %s41
      %p47 = scmp.eq.s32.totalorder %s16, 0
      %p48 = por %p46, %p47
      %p49 = scmp.ne.s32.totalorder %s38, %s41
      %p50 = scmp.eq.s32.totalorder %s21, 1
      %p51 = por %p49, %p50
      %p52 = scmp.ne.s32.totalorder %s41, %s42
      %p53 = scmp.eq.s32.totalorder %s21, 0
      %p54 = por %p52, %p53
      %p55 = scmp.ne.s32.totalorder %s41, %s42
      %p56 = scmp.eq.s32.totalorder %s22, 1
      %p57 = por %p55, %p56
      %p59 = scmp.ne.s32.totalorder %s42, %s58
      %p60 = scmp.eq.s32.totalorder %s22, 0
      %p61 = por %p59, %p60
      %s62 = ssub.s32 %s24, %s31
      %s63 = ssub.s32 %s23, %s35
      %s64 = sor.u32 %s62, %s63
      %p65 = scmp.eq.s32.totalorder %s64, 0
      %s67 = sadd.s32 %s66, 1
      %s68 = scalar_select %p65, %s66, %s67
      %p71 = pneg %p65
      %p72 = scmp.eq.s32.totalorder %s16, 1
      %p73 = por %p71, %p72
      %p74 = scmp.ne.s32.totalorder %s66, %s69
      %p75 = scmp.eq.s32.totalorder %s16, 0
      %p76 = por %p74, %p75
      %p77 = scmp.ne.s32.totalorder %s66, %s69
      %p78 = scmp.eq.s32.totalorder %s21, 1
      %p79 = por %p77, %p78
      %p80 = scmp.ne.s32.totalorder %s69, %s70
      %p81 = scmp.eq.s32.totalorder %s21, 0
      %p82 = por %p80, %p81
      %p83 = scmp.ne.s32.totalorder %s69, %s70
      %p84 = scmp.eq.s32.totalorder %s22, 1
      %p85 = por %p83, %p84
      %p87 = scmp.ne.s32.totalorder %s70, %s86
      %p88 = scmp.eq.s32.totalorder %s22, 0
      %p89 = por %p87, %p88
      %s90 = ssub.s32 %s23, %s35
      %p91 = scmp.eq.s32.totalorder %s90, 0
      %s93 = sadd.s32 %s92, 1
      %s94 = scalar_select %p91, %s92, %s93
      %p97 = pneg %p91
      %p98 = scmp.eq.s32.totalorder %s16, 1
      %p99 = por %p97, %p98
      %p100 = scmp.ne.s32.totalorder %s92, %s95
      %p101 = scmp.eq.s32.totalorder %s16, 0
      %p102 = por %p100, %p101
      %p103 = scmp.ne.s32.totalorder %s92, %s95
      %p104 = scmp.eq.s32.totalorder %s21, 1
      %p105 = por %p103, %p104
      %p106 = scmp.ne.s32.totalorder %s95, %s96
      %p107 = scmp.eq.s32.totalorder %s21, 0
      %p108 = por %p106, %p107
      %p109 = scmp.ne.s32.totalorder %s95, %s96
      %p110 = scmp.eq.s32.totalorder %s22, 1
      %p111 = por %p109, %p110
      %p113 = scmp.ne.s32.totalorder %s96, %s112
      %p114 = scmp.eq.s32.totalorder %s22, 0
      %p115 = por %p113, %p114
      %s116 = ssub.s32 %s23, %s35
      %p117 = scmp.eq.s32.totalorder %s116, 0
      %s119 = sadd.s32 %s118, 1
      %s120 = scalar_select %p117, %s118, %s119
      %p123 = pneg %p117
      %p124 = scmp.eq.s32.totalorder %s16, 1
      %p125 = por %p123, %p124
      %p126 = scmp.ne.s32.totalorder %s118, %s121
      %p127 = scmp.eq.s32.totalorder %s16, 0
      %p128 = por %p126, %p127
      %p129 = scmp.ne.s32.totalorder %s118, %s121
      %p130 = scmp.eq.s32.totalorder %s21, 1
      %p131 = por %p129, %p130
      %p132 = scmp.ne.s32.totalorder %s121, %s122
      %p133 = scmp.eq.s32.totalorder %s21, 0
      %p134 = por %p132, %p133
      %p135 = scmp.ne.s32.totalorder %s121, %s122
      %p136 = scmp.eq.s32.totalorder %s22, 1
      %p137 = por %p135, %p136
      %p139 = scmp.ne.s32.totalorder %s122, %s138
      %p140 = scmp.eq.s32.totalorder %s22, 0
      %p141 = por %p139, %p140
      %p142 = scmp.le.s32.totalorder 1, %s16
      %p143 = scmp.lt.s32.totalorder %s16, 3
      %p144 = pnand %p142, %p143
      %p145 = pneg %p144
      // Predicated region
      $region9: #{tpu_custom_call.1} parent=5 // pred_check
        _
      $region10: #{tpu_custom_call.1} parent=5 // pred_check_branch
        %147 = sbr.rel (%p144) target = $region12
      $region11: #{tpu_custom_call.1} parent=5 // pred_region
        %s148 = ssub.s32 %s16, 1
        // Predicated region
        $region13: #{tpu_custom_call.1} parent=11 // pred_check
          %p149 = pneg %p54
        $region14: #{tpu_custom_call.1} parent=11 // pred_check_branch
          %151 = sbr.rel (%p149) target = $region16
        $region15: #{tpu_custom_call.1} parent=11 // pred_region
          %s153 = ssub.s32 16, 16
          %154 = vsyncadd [#allocation3], %s153
          %s155 = smul.addr %s26, 16
          %s156 = scalar_lea.hbm %s0, %s155
          %s158 = sshll.u32 [#allocation2], 4
          %s159 = int_to_ptr.vmem [resolvable:$true] %s158
          %161 = dma.hbm_to_vmem [thread:$0]  %s156, 16, %s159, [#allocation3]
        $region16: #{tpu_custom_call.1} parent=11 // pred_fallthru
          _
      $region12: #{tpu_custom_call.1} parent=5 // pred_fallthru
        _
      %p162 = scmp.lt.s32.totalorder %s16, 2
      // Predicated region
      $region17: #{tpu_custom_call.1} parent=5 // pred_check
        %p163 = pneg %p162
      $region18: #{tpu_custom_call.1} parent=5 // pred_check_branch
        %165 = sbr.rel (%p163) target = $region20
      $region19: #{tpu_custom_call.1} parent=5 // pred_region
        // Predicated region
        $region21: #{tpu_custom_call.1} parent=19 // pred_check
          %p166 = pneg %p76
        $region22: #{tpu_custom_call.1} parent=19 // pred_check_branch
          %168 = sbr.rel (%p166) target = $region24
        $region23: #{tpu_custom_call.1} parent=19 // pred_region
          %s169 = sand.u32 %s66, 1
          %s170 = scalar_lea.sflag [#allocation6], %s169
          %s171 = sand.u32 %s66, 1
          %s172 = smul.addr %s171, 128
          %s173 = scalar_lea.vmem [#allocation5], %s172
          %s174 = smul.u32 16, %s24
          %s176 = ssub.s32 2048, 2048
          %177 = vsyncadd %s170, %s176
          %s178 = smul.addr %s174, 2
          %s179 = sadd.s32 %s23, %s178
          %s180 = smul.addr %s179, 128
          %s181 = scalar_lea.hbm %s1, %s180
          %s182 = sshll.u32 %s173, 4
          %s183 = int_to_ptr.vmem [resolvable:$true] %s182
          %188 = dma.hbm_to_vmem [thread:$0]  %s181, 2048, %s183, %s170, 256, 128, 8
        $region24: #{tpu_custom_call.1} parent=19 // pred_fallthru
          _
        // Predicated region
        $region25: #{tpu_custom_call.1} parent=19 // pred_check
          %p189 = pneg %p102
        $region26: #{tpu_custom_call.1} parent=19 // pred_check_branch
          %191 = sbr.rel (%p189) target = $region28
        $region27: #{tpu_custom_call.1} parent=19 // pred_region
          %p192 = scmp.lt.s32.totalorder %s23, 1
          %s193 = scalar_select %p192, %s23, 1
          %s194 = scalar_lea.vmem %s2, %s193
        $region28: #{tpu_custom_call.1} parent=19 // pred_fallthru
          _
      $region20: #{tpu_custom_call.1} parent=5 // pred_fallthru
        _
      %p195 = scmp.le.s32.totalorder 1, %s16
      %p196 = scmp.lt.s32.totalorder %s16, 3
      %p197 = pnand %p195, %p196
      %p198 = pneg %p197
      // Predicated region
      $region29: #{tpu_custom_call.1} parent=5 // pred_check
        _
      $region30: #{tpu_custom_call.1} parent=5 // pred_check_branch
        %200 = sbr.rel (%p197) target = $region32
      $region31: #{tpu_custom_call.1} parent=5 // pred_region
        %s201 = ssub.s32 %s16, 1
        // Predicated region
        $region33: #{tpu_custom_call.1} parent=31 // pred_check
          %p202 = pneg %p54
        $region34: #{tpu_custom_call.1} parent=31 // pred_check_branch
          %204 = sbr.rel (%p202) target = $region36
        $region35: #{tpu_custom_call.1} parent=31 // pred_region
          %205 = dma.done [#allocation3], 16
        $region36: #{tpu_custom_call.1} parent=31 // pred_fallthru
          _
        %s206 = sand.u32 %s69, 1
        %s207 = scalar_lea.sflag [#allocation6], %s206
        %s208 = sand.u32 %s69, 1
        %s209 = smul.addr %s208, 128
        %s210 = scalar_lea.vmem [#allocation5], %s209
        // Predicated region
        $region37: #{tpu_custom_call.1} parent=31 // pred_check
          %p211 = pneg %p82
        $region38: #{tpu_custom_call.1} parent=31 // pred_check_branch
          %213 = sbr.rel (%p211) target = $region40
        $region39: #{tpu_custom_call.1} parent=31 // pred_region
          %214 = dma.done %s207, 2048
        $region40: #{tpu_custom_call.1} parent=31 // pred_fallthru
          _
        %p215 = pneg %p54
        %p216 = pneg %p51
        %s217 = sand.u32 %s69, 1
        %s218 = scalar_lea.sflag [#allocation6], %s217
        %s219 = sand.u32 %s69, 1
        %s220 = smul.addr %s219, 128
        %s221 = scalar_lea.vmem [#allocation5], %s220
        %p222 = pneg %p82
        %p223 = pneg %p79
        %p224 = scmp.lt.s32.totalorder %s25, 1
        %s225 = scalar_select %p224, %s25, 1
        %s226 = scalar_lea.vmem %s2, %s225
        %p227 = pneg %p108
        %p228 = pneg %p105
        %p229 = pneg %p134
        %p230 = pneg %p131
        %s231 = sand.u32 %s121, 1
        %s232 = scalar_lea.sflag [#allocation4], %s231
        %s233 = sand.u32 %s121, 1
        %s234 = scalar_lea.vmem [#allocation7], %s233
        %s235 = smul.u32 16, %s26
        %p236 = scmp.lt.s32.totalorder %s25, 1
        %s237 = scalar_select %p236, %s25, 1
        %s238 = scalar_lea.vmem %s2, %s237
        %p239 = scmp.eq.s32.totalorder %s26, 0
        // Predicated region
        $region41: #{tpu_custom_call.1} parent=31 // pred_check
          %p240 = pneg %p239
        $region42: #{tpu_custom_call.1} parent=31 // pred_check_branch
          %242 = sbr.rel (%p240) target = $region44
        $region43: #{tpu_custom_call.1} parent=31 // pred_region
          %v243 = vld [vmem:[%s238] sm:$0x1]
          %244 = vst [vmem:[%s234] sm:$0x1] %v243
        $region44: #{tpu_custom_call.1} parent=31 // pred_fallthru
          _
        %v245 = vld [vmem:[%s234] sm:$0x1]
        %v246 = vld [vmem:[#allocation2] sm:$0x1]
        %v247 = vld [vmem:[%s210] sm:$0xff]
        %v248 = vld [vmem:[%s210 + $0x8] sm:$0xff]
        %v249 = vld [vmem:[%s210 + $0x10] sm:$0xff]
        %v250 = vld [vmem:[%s210 + $0x18] sm:$0xff]
        %v251 = vld [vmem:[%s210 + $0x20] sm:$0xff]
        %v252 = vld [vmem:[%s210 + $0x28] sm:$0xff]
        %v253 = vld [vmem:[%s210 + $0x30] sm:$0xff]
        %v254 = vld [vmem:[%s210 + $0x38] sm:$0xff]
        %v255 = vld [vmem:[%s210 + $0x40] sm:$0xff]
        %v256 = vld [vmem:[%s210 + $0x48] sm:$0xff]
        %v257 = vld [vmem:[%s210 + $0x50] sm:$0xff]
        %v258 = vld [vmem:[%s210 + $0x58] sm:$0xff]
        %v259 = vld [vmem:[%s210 + $0x60] sm:$0xff]
        %v260 = vld [vmem:[%s210 + $0x68] sm:$0xff]
        %v261 = vld [vmem:[%s210 + $0x70] sm:$0xff]
        %v262 = vld [vmem:[%s210 + $0x78] sm:$0xff]
        %263 = vmatprep.subr.mxu0 0.0
        %264 = vmatpush1.msra.mxu0 %v262
        %265 = vmatprep.subr.mxu0 0.0
        %266 = vmatpush1.msra.mxu0 %v261
        %267 = vmatprep.subr.mxu0 0.0
        %268 = vmatpush1.msra.mxu0 %v260
        %269 = vmatprep.subr.mxu0 0.0
        %270 = vmatpush1.msra.mxu0 %v259
        %271 = vmatprep.subr.mxu0 0.0
        %272 = vmatpush1.msra.mxu0 %v258
        %273 = vmatprep.subr.mxu0 0.0
        %274 = vmatpush1.msra.mxu0 %v257
        %275 = vmatprep.subr.mxu0 0.0
        %276 = vmatpush1.msra.mxu0 %v256
        %277 = vmatprep.subr.mxu0 0.0
        %278 = vmatpush1.msra.mxu0 %v255
        %279 = vmatprep.subr.mxu0 0.0
        %280 = vmatpush1.msra.mxu0 %v254
        %281 = vmatprep.subr.mxu0 0.0
        %282 = vmatpush1.msra.mxu0 %v253
        %283 = vmatprep.subr.mxu0 0.0
        %284 = vmatpush1.msra.mxu0 %v252
        %285 = vmatprep.subr.mxu0 0.0
        %286 = vmatpush1.msra.mxu0 %v251
        %287 = vmatprep.subr.mxu0 0.0
        %288 = vmatpush1.msra.mxu0 %v250
        %289 = vmatprep.subr.mxu0 0.0
        %290 = vmatpush1.msra.mxu0 %v249
        %291 = vmatprep.subr.mxu0 0.0
        %292 = vmatpush1.msra.mxu0 %v248
        %293 = vmatprep.subr.mxu0 0.0
        %294 = vmatpush1.msra.mxu0 %v247
        %295 = vmatprep.subr.mxu0 0.0
        %296 = vmatpush2.msra.mxu0 0.0
        %297 = vmatprep.subr.mxu0 0.0
        %298 = vmatpush2.msra.mxu0 0.0
        %299 = vmatprep.subr.mxu0 0.0
        %300 = vmatpush2.msra.mxu0 0.0
        %301 = vmatprep.subr.mxu0 0.0
        %302 = vmatpush2.msra.mxu0 0.0
        %303 = vmatprep.subr.mxu0 0.0
        %304 = vmatpush2.msra.mxu0 0.0
        %305 = vmatprep.subr.mxu0 0.0
        %306 = vmatpush2.msra.mxu0 0.0
        %307 = vmatprep.subr.mxu0 0.0
        %308 = vmatpush2.msra.mxu0 0.0
        %309 = vmatprep.subr.mxu0 0.0
        %310 = vmatpush2.msra.mxu0 0.0
        %311 = vmatprep.subr.mxu0 0.0
        %312 = vmatpush2.msra.mxu0 0.0
        %313 = vmatprep.subr.mxu0 0.0
        %314 = vmatpush2.msra.mxu0 0.0
        %315 = vmatprep.subr.mxu0 0.0
        %316 = vmatpush2.msra.mxu0 0.0
        %317 = vmatprep.subr.mxu0 0.0
        %318 = vmatpush2.msra.mxu0 0.0
        %319 = vmatprep.subr.mxu0 0.0
        %320 = vmatpush2.msra.mxu0 0.0
        %321 = vmatprep.subr.mxu0 0.0
        %322 = vmatpush2.msra.mxu0 0.0
        %323 = vmatprep.subr.mxu0 0.0
        %324 = vmatpush2.msra.mxu0 0.0
        %325 = vmatprep.subr.mxu0 0.0
        %326 = vmatpush2.msra.mxu0 0.0
        %327 = vmatprep.mubr.f32.mxu0 0.0
        %328 = vmatmul.mubr.f32.gmra.mxu0 %v246
        %v329 = vpop.f32.mrf.mxu0
        %v330 = vadd.f32 0.0, %v329
        %v331 = vpop.f32.mrf.mxu0
        %332 = vdwg.mxu0
        %v333 = vadd.f32 %v245, %v330
        %334 = vst [vmem:[%s234] sm:$0x1] %v333
        %s335 = sand.u32 %s121, 1
        %s336 = scalar_lea.sflag [#allocation4], %s335
        %s337 = sand.u32 %s121, 1
        %s338 = scalar_lea.vmem [#allocation7], %s337
        // Predicated region
        $region45: #{tpu_custom_call.1} parent=31 // pred_check
          %p339 = pneg %p131
        $region46: #{tpu_custom_call.1} parent=31 // pred_check_branch
          %341 = sbr.rel (%p339) target = $region48
        $region47: #{tpu_custom_call.1} parent=31 // pred_region
          %s343 = ssub.s32 16, 16
          %344 = vsyncadd %s336, %s343
          %s345 = smul.addr %s25, 16
          %s346 = scalar_lea.hbm %s3, %s345
          %s348 = sshll.u32 %s338, 4
          %s349 = int_to_ptr.vmem [resolvable:$true] %s348
          %351 = dma.vmem_to_hbm [thread:$0]  %s349, 16, %s346, %s336
        $region48: #{tpu_custom_call.1} parent=31 // pred_fallthru
          _
      $region32: #{tpu_custom_call.1} parent=5 // pred_fallthru
        _
      %p352 = scmp.le.s32.totalorder 2, %s16
      // Predicated region
      $region49: #{tpu_custom_call.1} parent=5 // pred_check
        %p353 = pneg %p352
      $region50: #{tpu_custom_call.1} parent=5 // pred_check_branch
        %355 = sbr.rel (%p353) target = $region52
      $region51: #{tpu_custom_call.1} parent=5 // pred_region
        %s356 = ssub.s32 %s16, 2
        // Predicated region
        $region53: #{tpu_custom_call.1} parent=51 // pred_check
          %p357 = pneg %p137
        $region54: #{tpu_custom_call.1} parent=51 // pred_check_branch
          %359 = sbr.rel (%p357) target = $region56
        $region55: #{tpu_custom_call.1} parent=51 // pred_region
          %s360 = sand.u32 %s122, 1
          %s361 = scalar_lea.sflag [#allocation4], %s360
          %s362 = sand.u32 %s122, 1
          %s363 = scalar_lea.vmem [#allocation7], %s362
          %364 = dma.done %s361, 16
        $region56: #{tpu_custom_call.1} parent=51 // pred_fallthru
          _
      $region52: #{tpu_custom_call.1} parent=5 // pred_fallthru
        _
    $region6: #{tpu_custom_call.1} parent=1 // loop_footer
      %s20 = sadd.s32 1, %s16
    $region7: #{tpu_custom_call.1} parent=1 // loop_footer_branch
      %15 = sbr.rel target = $region3
    $region8: #{tpu_custom_call.1} parent=1 // loop_exit
      _
    %365 = vsyncpa [#allocation3], 1
    %s366 = scalar_lea.sflag [#allocation3], 1
    %367 = vsyncpa %s366, 1
    %368 = vsyncpa [#allocation6], 1
    %s369 = scalar_lea.sflag [#allocation6], 1
    %370 = vsyncpa %s369, 1
    %371 = vsyncpa [#allocation4], 1
    %s372 = scalar_lea.sflag [#allocation4], 1
    %373 = vsyncpa %s372, 1

</llo_original>
